<compile_context>
chip_gen: v7x
topology: tpu7x:2x2x1
jax: 0.10.0
libtpu: 0.0.40
codegen_flags: <defaults>
</compile_context>

<pallas_src>
import numpy as np
import jax
import jax.numpy as jnp
from jax.experimental import pallas as pl
from jax.experimental.pallas import tpu as pltpu


def _choose_tile_rows(n_rows):
    """Row tile along the 128-lane axis.

    Whole-array single block unless n_rows is lane-aligned and large: per
    grid step costs ~600 cycles of overhead, and the working set here is tiny
    relative to VMEM, so fewer/bigger blocks win on v5e/v6e/v7x alike."""
    if n_rows % 128 != 0:
        return n_rows  # whole-array block (always a legal block shape)
    cap = 65536
    tile = 128
    while tile * 2 <= min(cap, n_rows) and n_rows % (tile * 2) == 0:
        tile *= 2
    return tile


def _make_logsoftmax_slab_kernel(head_offsets):
    """Kernel over a lane-dense (sum(o), tile_rows) slab.

    Each head occupies a static sublane sub-range [off, off+o); log_softmax is
    taken over that sub-range (axis=0, a short cross-sublane reduce), so every
    load/EUP op/store is dense along the 128-lane row axis."""

    def kernel(g_ref, o_ref):
        for (off, o) in head_offsets:  # static Python loop: heads are compile-time
            z = g_ref[off:off + o, :]                    # (o, tile_rows) f32
            m = jnp.max(z, axis=0, keepdims=True)
            s = z - m
            lse = jnp.log(jnp.sum(jnp.exp(s), axis=0, keepdims=True))
            o_ref[off:off + o, :] = s - lse

    return kernel


def fused_log_softmax_heads(gauss_slab, naction_heads):
    """gauss_slab: (sum(naction_heads), n_rows) f32 standard normals.

    Returns a slab of the same shape where each head's sublane sub-range holds
    log_softmax(gaussian) over that head's action dimension."""
    naction_heads = tuple(int(o) for o in naction_heads)
    sum_o, n_rows = gauss_slab.shape
    assert sum_o == sum(naction_heads)

    offsets = []
    off = 0
    for o in naction_heads:
        offsets.append((off, o))
        off += o

    tile_rows = _choose_tile_rows(n_rows)
    grid = (n_rows // tile_rows,)

    return pl.pallas_call(
        _make_logsoftmax_slab_kernel(tuple(offsets)),
        out_shape=jax.ShapeDtypeStruct((sum_o, n_rows), jnp.float32),
        grid=grid,
        in_specs=[pl.BlockSpec((sum_o, tile_rows), lambda i: (0, i))],
        out_specs=pl.BlockSpec((sum_o, tile_rows), lambda i: (0, i)),
        compiler_params=pltpu.CompilerParams(
            dimension_semantics=("parallel",),
            vmem_limit_bytes=64 * 1024 * 1024,
        ),
    )(gauss_slab)


class RandomPallas:
    """Mirrors Random.__init__ / Random.forward (forward pass only)."""

    def __init__(self, naction_heads, num_inputs, key):
        self.naction_heads = tuple(int(o) for o in naction_heads)
        # nn.Parameter(torch.randn(3)) -- unused in forward, kept for parity.
        self.parameter = jax.random.normal(key, (3,), dtype=jnp.float32)

    def __call__(self, x, key):
        sizes = x.shape[:-1]
        n_rows = int(np.prod(sizes)) if len(sizes) > 0 else 1
        sum_o = sum(self.naction_heads)

        k_g, k_v = jax.random.split(key)

        # Lane-dense gaussian slab: heads stacked on sublanes, rows on lanes.
        gauss = jax.random.normal(k_g, (sum_o, n_rows), dtype=jnp.float32)

        slab = fused_log_softmax_heads(gauss, self.naction_heads)

        # Split / transpose / reshape back to sizes + (o,) in the wrapper
        # (cheap XLA layout plumbing, keeps the kernel's outputs lane-dense).
        out = []
        off = 0
        for o in self.naction_heads:
            head = slab[off:off + o, :]                  # (o, n_rows)
            out.append(jnp.transpose(head).reshape(sizes + (o,)))
            off += o

        # Uniform draw: pure RNG, no kernel compute needed.
        v = jax.random.uniform(k_v, sizes + (1,), dtype=jnp.float32)
        return out, v


if __name__ == "__main__":
    # Small shapes consistent with the module: x is [batch=2, seq=8, hidden=32]
    key = jax.random.PRNGKey(0)
    k_param, k_x, k_fwd = jax.random.split(key, 3)

    naction_heads = (4, 6)
    num_inputs = 32
    x = jax.random.normal(k_x, (2, 8, num_inputs), dtype=jnp.float32)

    model = RandomPallas(naction_heads, num_inputs, k_param)
    out, v = model(x, k_fwd)

    out = [jax.block_until_ready(o) for o in out]
    v = jax.block_until_ready(v)

    # Sanity checks: shapes, uniform range, and log_softmax normalization.
    assert v.shape == (2, 8, 1)
    assert bool(jnp.all((v >= 0.0) & (v < 1.0))), "v not in [0, 1)"
    for o_dim, o_arr in zip(naction_heads, out):
        assert o_arr.shape == (2, 8, o_dim)
        sums = jnp.sum(jnp.exp(o_arr), axis=-1)
        assert bool(jnp.allclose(sums, 1.0, atol=1e-5)), "log_softmax not normalized"
        assert bool(jnp.all(o_arr <= 1e-6)), "log-probabilities must be <= 0"

    print("KERNEL_OK")
</pallas_src>

<mosaic_0001>
module attributes {stable_mosaic.version = 11 : i64} {
  func.func @kernel(%arg0: i32, %arg1: memref<10x16xf32, #tpu.memory_space<vmem>>, %arg2: memref<10x16xf32, #tpu.memory_space<vmem>>) attributes {dimension_semantics = [#tpu.dimension_semantics<parallel>], iteration_bounds = array<i64: 1>, scalar_prefetch = 0 : i64, scratch_operands = 0 : i64, tpu.core_type = #tpu.core_type<tc>, window_params = [{transform_indices = @transform_0, window_bounds = array<i64: 10, 16>}, {transform_indices = @transform_1, window_bounds = array<i64: 10, 16>}]} {
    %c0 = arith.constant 0 : index
    %c0_0 = arith.constant 0 : index
    %0 = vector.load %arg1[%c0, %c0_0] : memref<10x16xf32, #tpu.memory_space<vmem>>, vector<4x16xf32>
    %cst = arith.constant dense<0xFF800000> : vector<16xf32>
    %1 = vector.multi_reduction <maximumf>, %0, %cst [0] : vector<4x16xf32> to vector<16xf32>
    %2 = vector.shape_cast %1 : vector<16xf32> to vector<1x16xf32>
    %3 = vector.broadcast %2 : vector<1x16xf32> to vector<4x16xf32>
    %4 = arith.subf %0, %3 : vector<4x16xf32>
    %5 = math.exp %4 : vector<4x16xf32>
    %cst_1 = arith.constant dense<0.000000e+00> : vector<16xf32>
    %6 = vector.multi_reduction <add>, %5, %cst_1 [0] : vector<4x16xf32> to vector<16xf32>
    %7 = vector.shape_cast %6 : vector<16xf32> to vector<1x16xf32>
    %8 = math.log %7 : vector<1x16xf32>
    %9 = vector.broadcast %8 : vector<1x16xf32> to vector<4x16xf32>
    %10 = arith.subf %4, %9 : vector<4x16xf32>
    %c0_2 = arith.constant 0 : index
    %c0_3 = arith.constant 0 : index
    %11 = vector.load %arg2[%c0_2, %c0_3] : memref<10x16xf32, #tpu.memory_space<vmem>>, vector<4x16xf32>
    tpu.vector_store %arg2[%c0_2, %c0_3], %10 {strides = array<i32>} : memref<10x16xf32, #tpu.memory_space<vmem>>, vector<4x16xf32>,
    %c4 = arith.constant 4 : index
    %c0_4 = arith.constant 0 : index
    %12 = vector.load %arg1[%c4, %c0_4] : memref<10x16xf32, #tpu.memory_space<vmem>>, vector<6x16xf32>
    %cst_5 = arith.constant dense<0xFF800000> : vector<16xf32>
    %13 = vector.multi_reduction <maximumf>, %12, %cst_5 [0] : vector<6x16xf32> to vector<16xf32>
    %14 = vector.shape_cast %13 : vector<16xf32> to vector<1x16xf32>
    %15 = vector.broadcast %14 : vector<1x16xf32> to vector<6x16xf32>
    %16 = arith.subf %12, %15 : vector<6x16xf32>
    %17 = math.exp %16 : vector<6x16xf32>
    %cst_6 = arith.constant dense<0.000000e+00> : vector<16xf32>
    %18 = vector.multi_reduction <add>, %17, %cst_6 [0] : vector<6x16xf32> to vector<16xf32>
    %19 = vector.shape_cast %18 : vector<16xf32> to vector<1x16xf32>
    %20 = math.log %19 : vector<1x16xf32>
    %21 = vector.broadcast %20 : vector<1x16xf32> to vector<6x16xf32>
    %22 = arith.subf %16, %21 : vector<6x16xf32>
    %c4_7 = arith.constant 4 : index
    %c0_8 = arith.constant 0 : index
    %23 = vector.load %arg2[%c4_7, %c0_8] : memref<10x16xf32, #tpu.memory_space<vmem>>, vector<6x16xf32>
    tpu.vector_store %arg2[%c4_7, %c0_8], %22 {strides = array<i32>} : memref<10x16xf32, #tpu.memory_space<vmem>>, vector<6x16xf32>,
    return
  }
  func.func @transform_0(%arg0: i32) -> (i32, i32) {
    %c0_i32 = arith.constant 0 : i32
    %c0_i32_0 = arith.constant 0 : i32
    return %c0_i32, %arg0 : i32, i32
  }
  func.func @transform_1(%arg0: i32) -> (i32, i32) {
    %c0_i32 = arith.constant 0 : i32
    %c0_i32_0 = arith.constant 0 : i32
    return %c0_i32, %arg0 : i32, i32
  }
}

</mosaic_0001>

<llo_original>
// kernel: tpu_custom_call.1
$region0: #{tpu_custom_call.1}
  #allocation0 [shape = 'u32[]', space=smem, size = 0x4, offset = 0x4, fixed_abs, tag = 'smem constant byte address 0x4 - core index']
  #allocation1 [shape = 'u32[144,128]{1,0:T(1,128)}', space=vmem, size = 0x12000, scoped, tag = 'internal scratch']
  %s0 = inlined_call_operand.hbm [shape: f32[10,16], index: 0, kind: input, shape index: {}]
  %s1 = inlined_call_operand.hbm [shape: f32[10,16], index: 1, kind: output, shape index: {}]
  %s2 = sld [smem:[#allocation0]]
  $region18: #{tpu_custom_call.1} parent=0
    _
  %s4 = ssub.s32 1, %s2
  %s5 = scalar_select 0, %s4, %s2
  $region1: #{tpu_custom_call.1} parent=0
    #allocation2 [shape = 'u8[8192]{0}', space=vmem, size = 0x2000, scoped, tag = 'input window, operand 0, single buffered']
    #allocation3 [shape = 's32[1]{0}', space=sflag, size = 0x4, scoped, tag = 'scoped memory for tpu_custom_call.1']
    #allocation4 [shape = 's32[1]{0}', space=sflag, size = 0x4, scoped, tag = 'scoped memory for tpu_custom_call.1']
    #allocation5 [shape = 'u8[8192]{0}', space=vmem, size = 0x2000, scoped, tag = 'output window, operand 0, single buffered']
    %6 = vsyncpa [#allocation3], 0
    %7 = vsyncpa [#allocation4], 0
    // Predicated region
    $region2: #{tpu_custom_call.1} parent=1 // pred_check
      _
    $region3: #{tpu_custom_call.1} parent=1 // pred_check_branch
      %9 = sbr.rel (0) target = $region5
    $region4: #{tpu_custom_call.1} parent=1 // pred_region
      %s11 = ssub.s32 256, 256
      %12 = vsyncadd [#allocation3], %s11
      %s13 = sshll.u32 [#allocation2], 4
      %s14 = int_to_ptr.vmem [resolvable:$true] %s13
      %19 = dma.hbm_to_vmem [thread:$0]  %s0, 256, %s14, [#allocation3], 128, 128, 8
    $region5: #{tpu_custom_call.1} parent=1 // pred_fallthru
      _
    // Predicated region
    $region6: #{tpu_custom_call.1} parent=1 // pred_check
      _
    $region7: #{tpu_custom_call.1} parent=1 // pred_check_branch
      %21 = sbr.rel (0) target = $region9
    $region8: #{tpu_custom_call.1} parent=1 // pred_region
      %22 = dma.done [#allocation3], 256
    $region9: #{tpu_custom_call.1} parent=1 // pred_fallthru
      _
    %v23 = vld [vmem:[#allocation2] sm:$0xf]
    %vm24 = vcmask 125952
    %v25 = vsel %vm24, %v23, -inf
    %v26 = vrot.slane %v25, 4
    %v27 = vmax.f32 %v25, %v26
    %v28 = vrot.slane %v27, 2
    %v29 = vmax.f32 %v27, %v28
    %v30 = vrot.slane %v29, 1
    %v31 = vmax.f32 %v29, %v30
    %v32 = vsub.f32 %v23, %v31
    %v33 = vmul.f32 %v32, 1.442695
    %v34 = vpow.pop %v33
    %v35 = vsel %vm24, %v34, 0.0
    %v36 = vrot.slane %v35, 4
    %v37 = vadd.f32 %v35, %v36
    %v38 = vrot.slane %v37, 2
    %v39 = vadd.f32 %v37, %v38
    %v40 = vrot.slane %v39, 1
    %v41 = vadd.f32 %v39, %v40
    %v42 = vlog2.pop %v41
    %v43 = vmul.f32 %v42, 0.6931472
    %v44 = vsub.f32 %v32, %v43
    %45 = vst.msk [vmem:[#allocation5] sm:$0xf] %vm24, %v44
    %v46 = vld [vmem:[#allocation2 + $0x4] sm:$0x3f]
    %vm47 = vcmask 128000
    %v48 = vsel %vm47, %v46, -inf
    %v49 = vrot.slane %v48, 4
    %v50 = vmax.f32 %v48, %v49
    %v51 = vrot.slane %v50, 2
    %v52 = vmax.f32 %v50, %v51
    %v53 = vrot.slane %v52, 1
    %v54 = vmax.f32 %v52, %v53
    %v55 = vsub.f32 %v46, %v54
    %v56 = vmul.f32 %v55, 1.442695
    %v57 = vpow.pop %v56
    %v58 = vsel %vm47, %v57, 0.0
    %v59 = vrot.slane %v58, 4
    %v60 = vadd.f32 %v58, %v59
    %v61 = vrot.slane %v60, 2
    %v62 = vadd.f32 %v60, %v61
    %v63 = vrot.slane %v62, 1
    %v64 = vadd.f32 %v62, %v63
    %v65 = vlog2.pop %v64
    %v66 = vmul.f32 %v65, 0.6931472
    %v67 = vsub.f32 %v55, %v66
    %68 = vst.msk [vmem:[#allocation5 + $0x4] sm:$0x3f] %vm47, %v67
    // Predicated region
    $region10: #{tpu_custom_call.1} parent=1 // pred_check
      _
    $region11: #{tpu_custom_call.1} parent=1 // pred_check_branch
      %70 = sbr.rel (0) target = $region13
    $region12: #{tpu_custom_call.1} parent=1 // pred_region
      %s72 = ssub.s32 256, 256
      %73 = vsyncadd [#allocation4], %s72
      %s74 = sshll.u32 [#allocation5], 4
      %s75 = int_to_ptr.vmem [resolvable:$true] %s74
      %80 = dma.vmem_to_hbm [thread:$0]  %s75, 256, %s1, [#allocation4], 128, 128, 8
    $region13: #{tpu_custom_call.1} parent=1 // pred_fallthru
      _
    // Predicated region
    $region14: #{tpu_custom_call.1} parent=1 // pred_check
      _
    $region15: #{tpu_custom_call.1} parent=1 // pred_check_branch
      %82 = sbr.rel (0) target = $region17
    $region16: #{tpu_custom_call.1} parent=1 // pred_region
      %83 = dma.done [#allocation4], 256
    $region17: #{tpu_custom_call.1} parent=1 // pred_fallthru
      _
    %84 = vsyncpa [#allocation3], 1
    %85 = vsyncpa [#allocation4], 1

</llo_original>
